<compile_context>
chip_gen: v6e
topology: v6e:2x2x1
jax: 0.10.0
libtpu: 0.0.40
codegen_flags: <defaults>
</compile_context>

<pallas_src>
import jax
import jax.numpy as jnp
from jax.experimental import pallas as pl
from jax.experimental.pallas import tpu as pltpu

_LANE = 128


def _fused_linear_kernel(x_ref, z_ref, w1t_ref, w2t_ref, bias_ref, o_ref):
    """o = (2*x - z) @ W1.T + x @ W2.T + (b1 + b2), lane-dense padded output."""
    x = x_ref[...].astype(jnp.float32)      # (tm, in_f)
    z = z_ref[...].astype(jnp.float32)      # (tm, in_f)
    a = 2.0 * x - z                         # f32 elementwise (v5e-safe)
    w1t = w1t_ref[...]                      # (in_f, out_p) pre-transposed, lane-padded
    w2t = w2t_ref[...]                      # (in_f, out_p)
    bias = bias_ref[...]                    # (1, out_p)  = b1 + b2, lane-padded

    in_f = x.shape[-1]
    if in_f <= 8:
        # Tiny contraction dim: VPU broadcast-FMA path, no MXU push/drain.
        h = jnp.broadcast_to(bias, o_ref.shape).astype(jnp.float32)
        for k in range(in_f):               # static unroll (in_f == 2 here)
            h = h + a[:, k:k + 1] * w1t[k:k + 1, :]
            h = h + x[:, k:k + 1] * w2t[k:k + 1, :]
    else:
        # General path: two MXU matmuls summed (no in-kernel concat / relayout).
        h = (jnp.dot(a, w1t, preferred_element_type=jnp.float32)
             + jnp.dot(x, w2t, preferred_element_type=jnp.float32)
             + bias)
    o_ref[...] = h.astype(o_ref.dtype)


def _pick_block_rows(n):
    # Row tile for the grid: 512/256/128 when N is large (fits comfortably in
    # v7x's 64 MiB VMEM even double-buffered); otherwise take the whole array.
    for tm in (512, 256, 128):
        if n > tm and n % tm == 0:
            return tm
    return n


def custom_module_forward(x, z, w1, b1, w2, b2):
    n, in_f = x.shape
    out_f = w1.shape[0]
    out_p = pl.cdiv(out_f, _LANE) * _LANE   # lane-dense output width (>= 128)
    dt = x.dtype

    # Trace-time parameter prep (runs once under XLA, not inside the kernel):
    #   pre-transpose weights, zero-pad the output dim to a multiple of 128,
    #   fold the three bias contributions (b1 + b2 - b1 + b1) into one vector.
    w1t = jnp.zeros((in_f, out_p), dt).at[:, :out_f].set(w1.T.astype(dt))
    w2t = jnp.zeros((in_f, out_p), dt).at[:, :out_f].set(w2.T.astype(dt))
    bias = jnp.zeros((1, out_p), jnp.float32).at[0, :out_f].set(
        (b1 + b2).astype(jnp.float32))

    tm = _pick_block_rows(n)
    grid = (n // tm,)

    out_padded = pl.pallas_call(
        _fused_linear_kernel,
        out_shape=jax.ShapeDtypeStruct((n, out_p), dt),
        grid=grid,
        in_specs=[
            pl.BlockSpec((tm, in_f), lambda i: (i, 0)),       # x row block
            pl.BlockSpec((tm, in_f), lambda i: (i, 0)),       # z row block
            pl.BlockSpec((in_f, out_p), lambda i: (0, 0)),    # W1.T (resident)
            pl.BlockSpec((in_f, out_p), lambda i: (0, 0)),    # W2.T (resident)
            pl.BlockSpec((1, out_p), lambda i: (0, 0)),       # bias (resident)
        ],
        out_specs=pl.BlockSpec((tm, out_p), lambda i: (i, 0)),
        compiler_params=pltpu.CompilerParams(
            dimension_semantics=("parallel",)),
    )(x, z, w1t, w2t, bias)

    return out_padded[:, :out_f]


def reference_forward(x, z, w1, b1, w2, b2):
    lin1 = lambda t: t @ w1.T + b1
    lin2 = lambda t: t @ w2.T + b2
    h = lin1(x)
    h = h + lin2(x)
    h = h - lin1(z)
    h = h + lin1(x)
    return h


if __name__ == "__main__":
    key = jax.random.PRNGKey(0)
    k_x, k_z, k_w1, k_b1, k_w2, k_b2 = jax.random.split(key, 6)

    batch = 8
    in_features = 2
    out_features = 2

    # Deterministic synthetic parameters (mimic torch Linear uniform 1/sqrt(in))
    bound = 1.0 / (in_features ** 0.5)
    w1 = jax.random.uniform(k_w1, (out_features, in_features), jnp.float32, -bound, bound)
    b1 = jax.random.uniform(k_b1, (out_features,), jnp.float32, -bound, bound)
    w2 = jax.random.uniform(k_w2, (out_features, in_features), jnp.float32, -bound, bound)
    b2 = jax.random.uniform(k_b2, (out_features,), jnp.float32, -bound, bound)

    x = jax.random.normal(k_x, (batch, in_features), jnp.float32)
    z = jax.random.normal(k_z, (batch, in_features), jnp.float32)

    out = custom_module_forward(x, z, w1, b1, w2, b2)
    out = jax.block_until_ready(out)

    ref = reference_forward(x, z, w1, b1, w2, b2)
    assert out.shape == ref.shape, "shape mismatch vs reference"
    assert jnp.allclose(out, ref, atol=1e-5, rtol=1e-5), "mismatch vs reference"

    print("KERNEL_OK")
</pallas_src>

<mosaic_0001>
module attributes {stable_mosaic.version = 11 : i64} {
  func.func @_fused_linear_kernel(%arg0: i32, %arg1: memref<8x2xf32, #tpu.memory_space<vmem>>, %arg2: memref<8x2xf32, #tpu.memory_space<vmem>>, %arg3: memref<2x128xf32, #tpu.memory_space<vmem>>, %arg4: memref<2x128xf32, #tpu.memory_space<vmem>>, %arg5: memref<1x128xf32, #tpu.memory_space<vmem>>, %arg6: memref<8x128xf32, #tpu.memory_space<vmem>>) attributes {dimension_semantics = [#tpu.dimension_semantics<parallel>], iteration_bounds = array<i64: 1>, scalar_prefetch = 0 : i64, scratch_operands = 0 : i64, tpu.core_type = #tpu.core_type<tc>, window_params = [{transform_indices = @transform_0, window_bounds = array<i64: 8, 2>}, {transform_indices = @transform_1, window_bounds = array<i64: 8, 2>}, {pipeline_mode = #tpu.pipeline_mode<synchronous>, transform_indices = @transform_2, window_bounds = array<i64: 2, 128>}, {pipeline_mode = #tpu.pipeline_mode<synchronous>, transform_indices = @transform_3, window_bounds = array<i64: 2, 128>}, {pipeline_mode = #tpu.pipeline_mode<synchronous>, transform_indices = @transform_4, window_bounds = array<i64: 1, 128>}, {transform_indices = @transform_5, window_bounds = array<i64: 8, 128>}]} {
    %c0 = arith.constant 0 : index
    %c0_0 = arith.constant 0 : index
    %0 = vector.load %arg1[%c0, %c0_0] : memref<8x2xf32, #tpu.memory_space<vmem>>, vector<8x2xf32>
    %c0_1 = arith.constant 0 : index
    %c0_2 = arith.constant 0 : index
    %1 = vector.load %arg2[%c0_1, %c0_2] : memref<8x2xf32, #tpu.memory_space<vmem>>, vector<8x2xf32>
    %cst = arith.constant 2.000000e+00 : f32
    %2 = vector.broadcast %cst : f32 to vector<8x2xf32>
    %3 = arith.mulf %2, %0 : vector<8x2xf32>
    %4 = arith.subf %3, %1 : vector<8x2xf32>
    %c0_3 = arith.constant 0 : index
    %c0_4 = arith.constant 0 : index
    %5 = vector.load %arg3[%c0_3, %c0_4] : memref<2x128xf32, #tpu.memory_space<vmem>>, vector<2x128xf32>
    %c0_5 = arith.constant 0 : index
    %c0_6 = arith.constant 0 : index
    %6 = vector.load %arg4[%c0_5, %c0_6] : memref<2x128xf32, #tpu.memory_space<vmem>>, vector<2x128xf32>
    %c0_7 = arith.constant 0 : index
    %c0_8 = arith.constant 0 : index
    %7 = vector.load %arg5[%c0_7, %c0_8] : memref<1x128xf32, #tpu.memory_space<vmem>>, vector<1x128xf32>
    %8 = vector.shape_cast %7 : vector<1x128xf32> to vector<1x128xf32>
    %9 = vector.broadcast %8 : vector<1x128xf32> to vector<8x128xf32>
    %10 = vector.extract_strided_slice %4 {offsets = [0, 0], sizes = [8, 1], strides = [1, 1]} : vector<8x2xf32> to vector<8x1xf32>
    %11 = vector.extract_strided_slice %5 {offsets = [0, 0], sizes = [1, 128], strides = [1, 1]} : vector<2x128xf32> to vector<1x128xf32>
    %12 = vector.broadcast %10 : vector<8x1xf32> to vector<8x128xf32>
    %13 = vector.broadcast %11 : vector<1x128xf32> to vector<8x128xf32>
    %14 = arith.mulf %12, %13 : vector<8x128xf32>
    %15 = arith.addf %9, %14 : vector<8x128xf32>
    %16 = vector.extract_strided_slice %0 {offsets = [0, 0], sizes = [8, 1], strides = [1, 1]} : vector<8x2xf32> to vector<8x1xf32>
    %17 = vector.extract_strided_slice %6 {offsets = [0, 0], sizes = [1, 128], strides = [1, 1]} : vector<2x128xf32> to vector<1x128xf32>
    %18 = vector.broadcast %16 : vector<8x1xf32> to vector<8x128xf32>
    %19 = vector.broadcast %17 : vector<1x128xf32> to vector<8x128xf32>
    %20 = arith.mulf %18, %19 : vector<8x128xf32>
    %21 = arith.addf %15, %20 : vector<8x128xf32>
    %22 = vector.extract_strided_slice %4 {offsets = [0, 1], sizes = [8, 1], strides = [1, 1]} : vector<8x2xf32> to vector<8x1xf32>
    %23 = vector.extract_strided_slice %5 {offsets = [1, 0], sizes = [1, 128], strides = [1, 1]} : vector<2x128xf32> to vector<1x128xf32>
    %24 = vector.broadcast %22 : vector<8x1xf32> to vector<8x128xf32>
    %25 = vector.broadcast %23 : vector<1x128xf32> to vector<8x128xf32>
    %26 = arith.mulf %24, %25 : vector<8x128xf32>
    %27 = arith.addf %21, %26 : vector<8x128xf32>
    %28 = vector.extract_strided_slice %0 {offsets = [0, 1], sizes = [8, 1], strides = [1, 1]} : vector<8x2xf32> to vector<8x1xf32>
    %29 = vector.extract_strided_slice %6 {offsets = [1, 0], sizes = [1, 128], strides = [1, 1]} : vector<2x128xf32> to vector<1x128xf32>
    %30 = vector.broadcast %28 : vector<8x1xf32> to vector<8x128xf32>
    %31 = vector.broadcast %29 : vector<1x128xf32> to vector<8x128xf32>
    %32 = arith.mulf %30, %31 : vector<8x128xf32>
    %33 = arith.addf %27, %32 : vector<8x128xf32>
    %c0_9 = arith.constant 0 : index
    %c0_10 = arith.constant 0 : index
    %34 = vector.load %arg6[%c0_9, %c0_10] : memref<8x128xf32, #tpu.memory_space<vmem>>, vector<8x128xf32>
    tpu.vector_store %arg6[%c0_9, %c0_10], %33 {strides = array<i32>} : memref<8x128xf32, #tpu.memory_space<vmem>>, vector<8x128xf32>,
    return
  }
  func.func @transform_0(%arg0: i32) -> (i32, i32) {
    %c0_i32 = arith.constant 0 : i32
    %c0_i32_0 = arith.constant 0 : i32
    return %arg0, %c0_i32 : i32, i32
  }
  func.func @transform_1(%arg0: i32) -> (i32, i32) {
    %c0_i32 = arith.constant 0 : i32
    %c0_i32_0 = arith.constant 0 : i32
    return %arg0, %c0_i32 : i32, i32
  }
  func.func @transform_2(%arg0: i32) -> (i32, i32) {
    %c0_i32 = arith.constant 0 : i32
    %c0_i32_0 = arith.constant 0 : i32
    %c0_i32_1 = arith.constant 0 : i32
    return %c0_i32, %c0_i32_0 : i32, i32
  }
  func.func @transform_3(%arg0: i32) -> (i32, i32) {
    %c0_i32 = arith.constant 0 : i32
    %c0_i32_0 = arith.constant 0 : i32
    %c0_i32_1 = arith.constant 0 : i32
    return %c0_i32, %c0_i32_0 : i32, i32
  }
  func.func @transform_4(%arg0: i32) -> (i32, i32) {
    %c0_i32 = arith.constant 0 : i32
    %c0_i32_0 = arith.constant 0 : i32
    %c0_i32_1 = arith.constant 0 : i32
    return %c0_i32, %c0_i32_0 : i32, i32
  }
  func.func @transform_5(%arg0: i32) -> (i32, i32) {
    %c0_i32 = arith.constant 0 : i32
    %c0_i32_0 = arith.constant 0 : i32
    return %arg0, %c0_i32 : i32, i32
  }
}

</mosaic_0001>

<llo_original>
// kernel: tpu_custom_call.1
$region0: #{tpu_custom_call.1}
  #allocation0 [shape = 'u32[]', space=smem, size = 0x4, offset = 0x4, fixed_abs, tag = 'smem constant byte address 0x4 - core index']
  #allocation1 [shape = 'u32[144,128]{1,0:T(1,128)}', space=vmem, size = 0x12000, scoped, tag = 'internal scratch']
  %s0 = inlined_call_operand.vmem [shape: f32[8,2], index: 0, kind: input, shape index: {}]
  %s1 = inlined_call_operand.vmem [shape: f32[8,2], index: 1, kind: input, shape index: {}]
  %s2 = inlined_call_operand.vmem [shape: f32[2,128], index: 2, kind: input, shape index: {}]
  %s3 = inlined_call_operand.vmem [shape: f32[2,128], index: 3, kind: input, shape index: {}]
  %s4 = inlined_call_operand.vmem [shape: f32[1,128], index: 4, kind: input, shape index: {}]
  %s5 = inlined_call_operand.hbm [shape: f32[8,128], index: 5, kind: output, shape index: {}]
  %s6 = sld [smem:[#allocation0]]
  $region30: #{tpu_custom_call.1} parent=0
    _
  %s8 = ssub.s32 1, %s6
  %s9 = scalar_select 0, %s8, %s6
  $region1: #{tpu_custom_call.1} parent=0
    #allocation2 [shape = 'u8[4096]{0}', space=vmem, size = 0x1000, scoped, tag = 'output window, operand 0, single buffered']
    #allocation3 [shape = 's32[1]{0}', space=sflag, size = 0x4, scoped, tag = 'scoped memory for tpu_custom_call.1']
    %10 = vsyncpa [#allocation3], 0
    // Predicated region
    $region2: #{tpu_custom_call.1} parent=1 // pred_check
      _
    $region3: #{tpu_custom_call.1} parent=1 // pred_check_branch
      %12 = sbr.rel (0) target = $region5
    $region4: #{tpu_custom_call.1} parent=1 // pred_region
      _
    $region5: #{tpu_custom_call.1} parent=1 // pred_fallthru
      _
    // Predicated region
    $region6: #{tpu_custom_call.1} parent=1 // pred_check
      _
    $region7: #{tpu_custom_call.1} parent=1 // pred_check_branch
      %14 = sbr.rel (0) target = $region9
    $region8: #{tpu_custom_call.1} parent=1 // pred_region
      _
    $region9: #{tpu_custom_call.1} parent=1 // pred_fallthru
      _
    // Predicated region
    $region10: #{tpu_custom_call.1} parent=1 // pred_check
      _
    $region11: #{tpu_custom_call.1} parent=1 // pred_check_branch
      %16 = sbr.rel (0) target = $region13
    $region12: #{tpu_custom_call.1} parent=1 // pred_region
      _
    $region13: #{tpu_custom_call.1} parent=1 // pred_fallthru
      _
    // Predicated region
    $region14: #{tpu_custom_call.1} parent=1 // pred_check
      _
    $region15: #{tpu_custom_call.1} parent=1 // pred_check_branch
      %18 = sbr.rel (0) target = $region17
    $region16: #{tpu_custom_call.1} parent=1 // pred_region
      _
    $region17: #{tpu_custom_call.1} parent=1 // pred_fallthru
      _
    // Predicated region
    $region18: #{tpu_custom_call.1} parent=1 // pred_check
      _
    $region19: #{tpu_custom_call.1} parent=1 // pred_check_branch
      %20 = sbr.rel (0) target = $region21
    $region20: #{tpu_custom_call.1} parent=1 // pred_region
      _
    $region21: #{tpu_custom_call.1} parent=1 // pred_fallthru
      _
    %v21 = vld [vmem:[%s0] sm:$0xff]
    %v22 = vld [vmem:[%s1] sm:$0xff]
    %v23 = vmul.f32 %v21, 2.0
    %v24 = vsub.f32 %v23, %v22
    %v25 = vld [vmem:[%s2] sm:$0x3]
    %v26 = vld [vmem:[%s3] sm:$0x3]
    %v27 = vld [vmem:[%s4] sm:$0x1]
    %v29 = vlaneseq
    %v30 = vshrl.u32 %v29, 7
    %v31 = vsub.s32 0, %v30
    %v32 = vrot.slane %v27, %v31
    %35 = vset.pattern.permute.xlu0 0
    %36 = vperm.xlu0 %35, %v24
    %v37 = vpop.permute.xlu0 %36
    %v39 = vlaneseq
    %v40 = vshrl.u32 %v39, 7
    %v41 = vsub.s32 0, %v40
    %v42 = vrot.slane %v25, %v41
    %v43 = vmul.f32 %v37, %v42
    %v44 = vadd.f32 %v32, %v43
    %46 = vset.pattern.permute.xlu0 0
    %47 = vperm.xlu0 %46, %v21
    %v48 = vpop.permute.xlu0 %47
    %v50 = vlaneseq
    %v51 = vshrl.u32 %v50, 7
    %v52 = vsub.s32 0, %v51
    %v53 = vrot.slane %v26, %v52
    %v54 = vmul.f32 %v48, %v53
    %v55 = vadd.f32 %v44, %v54
    %56 = vset.pattern.permute.xlu0 1
    %57 = vperm.xlu0 %56, %v24
    %v58 = vpop.permute.xlu0 %57
    %v60 = vlaneseq
    %v61 = vshrl.u32 %v60, 7
    %v62 = vsub.s32 1, %v61
    %v63 = vrot.slane %v25, %v62
    %v64 = vmul.f32 %v58, %v63
    %v65 = vadd.f32 %v55, %v64
    %66 = vset.pattern.permute.xlu0 1
    %67 = vperm.xlu0 %66, %v21
    %v68 = vpop.permute.xlu0 %67
    %v70 = vlaneseq
    %v71 = vshrl.u32 %v70, 7
    %v72 = vsub.s32 1, %v71
    %v73 = vrot.slane %v26, %v72
    %v74 = vmul.f32 %v68, %v73
    %v75 = vadd.f32 %v65, %v74
    %76 = vst [vmem:[#allocation2] sm:$0xff] %v75
    // Predicated region
    $region22: #{tpu_custom_call.1} parent=1 // pred_check
      _
    $region23: #{tpu_custom_call.1} parent=1 // pred_check_branch
      %78 = sbr.rel (0) target = $region25
    $region24: #{tpu_custom_call.1} parent=1 // pred_region
      %s80 = ssub.s32 128, 128
      %81 = vsyncadd [#allocation3], %s80
      %s83 = sshll.u32 [#allocation2], 4
      %s84 = int_to_ptr.vmem [resolvable:$true] %s83
      %86 = dma.vmem_to_hbm [thread:$0]  %s84, 128, %s5, [#allocation3]
    $region25: #{tpu_custom_call.1} parent=1 // pred_fallthru
      _
    // Predicated region
    $region26: #{tpu_custom_call.1} parent=1 // pred_check
      _
    $region27: #{tpu_custom_call.1} parent=1 // pred_check_branch
      %88 = sbr.rel (0) target = $region29
    $region28: #{tpu_custom_call.1} parent=1 // pred_region
      %89 = dma.done [#allocation3], 128
    $region29: #{tpu_custom_call.1} parent=1 // pred_fallthru
      _
    %90 = vsyncpa [#allocation3], 1

</llo_original>
